<compile_context>
chip_gen: v7x
topology: tpu7x:2x2x1
jax: 0.10.0
libtpu: 0.0.40
codegen_flags: <defaults>
</compile_context>

<pallas_src>
import functools

import jax
import jax.numpy as jnp
from jax.experimental import pallas as pl
from jax.experimental.pallas import tpu as pltpu


def _round_up(x, m):
    return ((x + m - 1) // m) * m


# ----------------------------------------------------------------------------
# Kernel: one (batch-tile, out-tile) of  out = dropout(relu(x @ W^T + b))
# ----------------------------------------------------------------------------
def _hidden_layer_kernel(seed_ref, x_ref, wt_ref, b_ref, o_ref, *,
                         apply_dropout: bool, dropout_p: float,
                         tb: int, tn: int, out_dim: int):
    # MXU matmul: bf16 operands, f32 accumulation.
    y = jnp.dot(x_ref[...], wt_ref[...], preferred_element_type=jnp.float32)
    y = y + b_ref[...]                       # (1, tn) broadcast bias add
    y = jnp.maximum(y, 0.0)                  # ReLU

    if apply_dropout and dropout_p >= 1.0:
        y = jnp.zeros_like(y)
    elif apply_dropout:
        # Stateless counter-based hash (lowbias32) over global element coords.
        row = jax.lax.broadcasted_iota(jnp.int32, y.shape, 0) + pl.program_id(0) * tb
        col = jax.lax.broadcasted_iota(jnp.int32, y.shape, 1) + pl.program_id(1) * tn
        h = (row * out_dim + col).astype(jnp.uint32)
        h = h ^ (seed_ref[0].astype(jnp.uint32) * jnp.uint32(0x9E3779B9))
        h = h ^ (h >> 16)
        h = h * jnp.uint32(0x7FEB352D)
        h = h ^ (h >> 15)
        h = h * jnp.uint32(0x846CA68B)
        h = h ^ (h >> 16)
        # Single unsigned compare for the keep mask (p quantized to 2^-32).
        thresh = jnp.uint32(min(int(round(dropout_p * 2.0 ** 32)), 0xFFFFFFFF))
        keep = h >= thresh
        scale = jnp.float32(1.0 / (1.0 - dropout_p))
        y = jnp.where(keep, y * scale, 0.0)

    o_ref[...] = y.astype(o_ref.dtype)


# ----------------------------------------------------------------------------
# Wrapper
# ----------------------------------------------------------------------------
def _vmem_limit_bytes():
    # Per-generation scoped-VMEM budget: stay well inside physical VMEM
    # (v5e/v6e: 128 MiB physical, v7x: 64 MiB physical).
    try:
        phys = pltpu.get_tpu_info().vmem_capacity_bytes
        return int(min(phys * 3 // 4, 100 * 1024 * 1024))
    except Exception:
        return 48 * 1024 * 1024  # conservative, safe on every generation


def hidden_layer_forward(x, weight, bias, *, dropout=0.0, train=False,
                         seed=0, block_b=256, block_n=None):
    """x: (B, in_dim); weight: (out_dim, in_dim); bias: (out_dim,) -> (B, out_dim)."""
    B, in_dim = x.shape
    out_dim = weight.shape[0]

    # bf16 MXU operands (f32 accumulation in-kernel).  In production, store the
    # weight pre-transposed (in_dim, out_dim) in bf16 so this transpose/cast is
    # done once outside the hot loop (or is folded by jit).
    x_bf = x.astype(jnp.bfloat16)
    wt = weight.T.astype(jnp.bfloat16)                    # (in_dim, out_dim)
    b2 = bias.reshape(1, out_dim).astype(jnp.float32)     # (1, out_dim)

    # --- batch (M) tiling ---------------------------------------------------
    tb = min(int(block_b), B)
    if tb < B:
        tb = max(8, (tb // 8) * 8)
    n_b = pl.cdiv(B, tb)

    # --- out_dim (N) tiling: bound the resident W^T footprint ----------------
    if block_n is not None:
        tn = min(int(block_n), out_dim)
        if tn < out_dim:
            tn = max(128, (tn // 128) * 128)
    elif out_dim <= 512:
        tn = out_dim
    else:
        # keep each bf16 W^T tile around <=4 MiB, lane-dense multiple of 128
        max_tn = max(128, ((4 * 1024 * 1024) // (in_dim * 2)) // 128 * 128)
        tn = min(_round_up(out_dim, 128), max_tn)
    n_n = pl.cdiv(out_dim, tn)

    # v7x: make sure there are >= 2 grid steps so both TensorCores get work.
    if n_b * n_n == 1 and B >= 16:
        tb = max(8, _round_up(pl.cdiv(B, 2), 8))
        n_b = pl.cdiv(B, tb)

    apply_dropout = bool(train) and float(dropout) > 0.0
    seed_arr = jnp.asarray([seed], dtype=jnp.int32)

    kernel = functools.partial(
        _hidden_layer_kernel,
        apply_dropout=apply_dropout, dropout_p=float(dropout),
        tb=tb, tn=tn, out_dim=out_dim)

    grid_spec = pltpu.PrefetchScalarGridSpec(
        num_scalar_prefetch=1,                               # dropout seed -> SMEM
        grid=(n_b, n_n),
        in_specs=[
            pl.BlockSpec((tb, in_dim), lambda i, j, s: (i, 0)),   # x: streamed
            pl.BlockSpec((in_dim, tn), lambda i, j, s: (0, j)),   # W^T tile
            pl.BlockSpec((1, tn), lambda i, j, s: (0, j)),        # bias tile
        ],
        out_specs=pl.BlockSpec((tb, tn), lambda i, j, s: (i, j)),
    )

    return pl.pallas_call(
        kernel,
        out_shape=jax.ShapeDtypeStruct((B, out_dim), jnp.float32),
        grid_spec=grid_spec,
        compiler_params=pltpu.CompilerParams(
            dimension_semantics=("parallel", "parallel"),
            vmem_limit_bytes=_vmem_limit_bytes(),
        ),
    )(seed_arr, x_bf, wt, b2)


# ----------------------------------------------------------------------------
# Self-test
# ----------------------------------------------------------------------------
if __name__ == "__main__":
    key = jax.random.PRNGKey(0)
    k_w, k_b, k_x, k_w2, k_b2, k_x2 = jax.random.split(key, 6)

    def reference(x, w, b):
        # f32 reference with bf16-rounded operands (matches MXU bf16 / f32-acc).
        xb = x.astype(jnp.bfloat16).astype(jnp.float32)
        wb = w.astype(jnp.bfloat16).astype(jnp.float32)
        y = jnp.dot(xb, wb.T, precision=jax.lax.Precision.HIGHEST) + b
        return jnp.maximum(y, 0.0)

    # Small shapes consistent with the module: batch=8, in_dim=32, out_dim=64.
    B, in_dim, out_dim, p = 8, 32, 64, 0.5
    bound = (6.0 / (in_dim + out_dim)) ** 0.5              # xavier_uniform_
    weight = jax.random.uniform(k_w, (out_dim, in_dim), jnp.float32, -bound, bound)
    bbound = 1.0 / in_dim ** 0.5                           # torch Linear bias init
    bias = jax.random.uniform(k_b, (out_dim,), jnp.float32, -bbound, bbound)
    x = jax.random.normal(k_x, (B, in_dim), jnp.float32)

    ref = reference(x, weight, bias)

    # Eval mode (dropout inactive) -- must match the Linear+ReLU reference.
    out_eval = jax.block_until_ready(
        hidden_layer_forward(x, weight, bias, dropout=p, train=False))
    assert out_eval.shape == (B, out_dim)
    assert jnp.allclose(out_eval, ref, atol=1e-3, rtol=1e-3)

    # Train mode (dropout active) -- every element is either 0 or ref/(1-p).
    out_train = jax.block_until_ready(
        hidden_layer_forward(x, weight, bias, dropout=p, train=True, seed=123))
    scaled = ref / (1.0 - p)
    elem_ok = jnp.minimum(jnp.abs(out_train), jnp.abs(out_train - scaled)) < 2e-3
    assert bool(jnp.all(elem_ok))
    pos = ref > 0
    keep_frac = jnp.sum((out_train > 0) & pos) / jnp.maximum(jnp.sum(pos), 1)
    assert 0.2 < float(keep_frac) < 0.8        # roughly half the activations survive

    # Larger case: multiple batch tiles, ragged last batch block (no padding),
    # and a forced out_dim grid axis (block_n) to exercise N tiling.
    B2, in2, out2 = 300, 128, 256
    bound2 = (6.0 / (in2 + out2)) ** 0.5
    w2 = jax.random.uniform(k_w2, (out2, in2), jnp.float32, -bound2, bound2)
    b2v = jax.random.uniform(k_b2, (out2,), jnp.float32,
                             -1.0 / in2 ** 0.5, 1.0 / in2 ** 0.5)
    x2 = jax.random.normal(k_x2, (B2, in2), jnp.float32)
    out_big = jax.block_until_ready(
        hidden_layer_forward(x2, w2, b2v, dropout=0.3, train=False,
                             block_b=128, block_n=128))
    ref2 = reference(x2, w2, b2v)
    assert out_big.shape == (B2, out2)
    assert jnp.allclose(out_big, ref2, atol=1e-3, rtol=1e-3)

    print("KERNEL_OK")
</pallas_src>

<mosaic_0001>
module attributes {stable_mosaic.version = 11 : i64} {
  func.func @_hidden_layer_kernel(%arg0: i32, %arg1: i32, %arg2: memref<1xi32, #tpu.memory_space<smem>>, %arg3: memref<8x32xbf16, #tpu.memory_space<vmem>>, %arg4: memref<32x64xbf16, #tpu.memory_space<vmem>>, %arg5: memref<1x64xf32, #tpu.memory_space<vmem>>, %arg6: memref<8x64xf32, #tpu.memory_space<vmem>>) attributes {dimension_semantics = [#tpu.dimension_semantics<parallel>, #tpu.dimension_semantics<parallel>], iteration_bounds = array<i64: 1, 1>, scalar_prefetch = 1 : i64, scratch_operands = 0 : i64, tpu.core_type = #tpu.core_type<tc>, window_params = [{transform_indices = @transform_0, window_bounds = array<i64: 8, 32>}, {transform_indices = @transform_1, window_bounds = array<i64: 32, 64>}, {transform_indices = @transform_2, window_bounds = array<i64: 1, 64>}, {transform_indices = @transform_3, window_bounds = array<i64: 8, 64>}]} {
    %c0 = arith.constant 0 : index
    %c0_0 = arith.constant 0 : index
    %0 = vector.load %arg3[%c0, %c0_0] : memref<8x32xbf16, #tpu.memory_space<vmem>>, vector<8x32xbf16>
    %c0_1 = arith.constant 0 : index
    %c0_2 = arith.constant 0 : index
    %1 = vector.load %arg4[%c0_1, %c0_2] : memref<32x64xbf16, #tpu.memory_space<vmem>>, vector<32x64xbf16>
    %cst = arith.constant dense<0.000000e+00> : vector<8x64xf32>
    %2 = tpu.matmul %0, %1, %cst {dimension_numbers = #tpu.dot_dimension_numbers<[1], [0], [0], [1], [0, 0, 1, 1], [], []>} : vector<8x32xbf16>, vector<32x64xbf16>, vector<8x64xf32> -> vector<8x64xf32>
    %c0_3 = arith.constant 0 : index
    %c0_4 = arith.constant 0 : index
    %3 = vector.load %arg5[%c0_3, %c0_4] : memref<1x64xf32, #tpu.memory_space<vmem>>, vector<1x64xf32>
    %4 = vector.broadcast %3 : vector<1x64xf32> to vector<8x64xf32>
    %5 = arith.addf %2, %4 : vector<8x64xf32>
    %cst_5 = arith.constant 0.000000e+00 : f32
    %6 = vector.broadcast %cst_5 : f32 to vector<8x64xf32>
    %7 = arith.maximumf %5, %6 : vector<8x64xf32>
    %c0_6 = arith.constant 0 : index
    %c0_7 = arith.constant 0 : index
    %8 = vector.load %arg6[%c0_6, %c0_7] : memref<8x64xf32, #tpu.memory_space<vmem>>, vector<8x64xf32>
    tpu.vector_store %arg6[%c0_6, %c0_7], %7 {strides = array<i32>} : memref<8x64xf32, #tpu.memory_space<vmem>>, vector<8x64xf32>,
    return
  }
  func.func @transform_0(%arg0: i32, %arg1: i32, %arg2: memref<1xi32, #tpu.memory_space<smem>>) -> (i32, i32) {
    %c0_i32 = arith.constant 0 : i32
    %c0_i32_0 = arith.constant 0 : i32
    return %arg0, %c0_i32 : i32, i32
  }
  func.func @transform_1(%arg0: i32, %arg1: i32, %arg2: memref<1xi32, #tpu.memory_space<smem>>) -> (i32, i32) {
    %c0_i32 = arith.constant 0 : i32
    %c0_i32_0 = arith.constant 0 : i32
    return %c0_i32, %arg1 : i32, i32
  }
  func.func @transform_2(%arg0: i32, %arg1: i32, %arg2: memref<1xi32, #tpu.memory_space<smem>>) -> (i32, i32) {
    %c0_i32 = arith.constant 0 : i32
    %c0_i32_0 = arith.constant 0 : i32
    return %c0_i32, %arg1 : i32, i32
  }
  func.func @transform_3(%arg0: i32, %arg1: i32, %arg2: memref<1xi32, #tpu.memory_space<smem>>) -> (i32, i32) {
    %c0_i32 = arith.constant 0 : i32
    return %arg0, %arg1 : i32, i32
  }
}

</mosaic_0001>

<llo_original>
// kernel: tpu_custom_call.1
$region0: #{tpu_custom_call.1}
  #allocation0 [shape = 'u32[]', space=smem, size = 0x4, offset = 0x4, fixed_abs, tag = 'smem constant byte address 0x4 - core index']
  #allocation1 [shape = 'u32[144,128]{1,0:T(1,128)}', space=vmem, size = 0x12000, scoped, tag = 'internal scratch']
  #allocation2 [shape = 's32[1]{0}', space=sflag, size = 0x4, scoped, tag = 'scoped memory for tpu_custom_call.1']
  #allocation3 [shape = 's32[1]{0:T(128)S(6)}', space=smem, size = 0x200, scoped, tag = 'prefetched SMEM operand 0']
  %s0 = inlined_call_operand.<no memory space> [shape: s32[1], index: 0, kind: input, shape index: {}]
  %s1 = inlined_call_operand.hbm [shape: bf16[8,32], index: 1, kind: input, shape index: {}]
  %s2 = inlined_call_operand.hbm [shape: bf16[32,64], index: 2, kind: input, shape index: {}]
  %s3 = inlined_call_operand.vmem [shape: f32[1,64], index: 3, kind: input, shape index: {}]
  %s4 = inlined_call_operand.hbm [shape: f32[8,64], index: 4, kind: output, shape index: {}]
  %s5 = sld [smem:[#allocation0]]
  $region30: #{tpu_custom_call.1} parent=0
    _
  %s7 = ssub.s32 1, %s5
  %s8 = scalar_select 0, %s7, %s5
  %9 = sst [smem:[#allocation3]] %s0
  $region1: #{tpu_custom_call.1} parent=0
    #allocation4 [shape = 'u8[2048]{0}', space=vmem, size = 0x800, scoped, tag = 'input window, operand 1, single buffered']
    #allocation5 [shape = 's32[1]{0}', space=sflag, size = 0x4, scoped, tag = 'scoped memory for tpu_custom_call.1']
    #allocation6 [shape = 's32[1]{0}', space=sflag, size = 0x4, scoped, tag = 'scoped memory for tpu_custom_call.1']
    #allocation7 [shape = 'u8[8192]{0}', space=vmem, size = 0x2000, scoped, tag = 'input window, operand 2, single buffered']
    #allocation8 [shape = 's32[1]{0}', space=sflag, size = 0x4, scoped, tag = 'scoped memory for tpu_custom_call.1']
    #allocation9 [shape = 'u8[4096]{0}', space=vmem, size = 0x1000, scoped, tag = 'output window, operand 0, single buffered']
    %10 = vsyncpa [#allocation5], 0
    %11 = vsyncpa [#allocation8], 0
    %12 = vsyncpa [#allocation6], 0
    // Predicated region
    $region2: #{tpu_custom_call.1} parent=1 // pred_check
      _
    $region3: #{tpu_custom_call.1} parent=1 // pred_check_branch
      %14 = sbr.rel (0) target = $region5
    $region4: #{tpu_custom_call.1} parent=1 // pred_region
      %s16 = ssub.s32 64, 64
      %17 = vsyncadd [#allocation5], %s16
      %s19 = sshll.u32 [#allocation4], 4
      %s20 = int_to_ptr.vmem [resolvable:$true] %s19
      %22 = dma.hbm_to_vmem [thread:$0]  %s1, 64, %s20, [#allocation5]
    $region5: #{tpu_custom_call.1} parent=1 // pred_fallthru
      _
    // Predicated region
    $region6: #{tpu_custom_call.1} parent=1 // pred_check
      _
    $region7: #{tpu_custom_call.1} parent=1 // pred_check_branch
      %24 = sbr.rel (0) target = $region9
    $region8: #{tpu_custom_call.1} parent=1 // pred_region
      %s26 = ssub.s32 256, 256
      %27 = vsyncadd [#allocation8], %s26
      %s28 = sshll.u32 [#allocation7], 4
      %s29 = int_to_ptr.vmem [resolvable:$true] %s28
      %34 = dma.hbm_to_vmem [thread:$0]  %s2, 256, %s29, [#allocation8], 64, 64, 4
    $region9: #{tpu_custom_call.1} parent=1 // pred_fallthru
      _
    // Predicated region
    $region10: #{tpu_custom_call.1} parent=1 // pred_check
      _
    $region11: #{tpu_custom_call.1} parent=1 // pred_check_branch
      %36 = sbr.rel (0) target = $region13
    $region12: #{tpu_custom_call.1} parent=1 // pred_region
      _
    $region13: #{tpu_custom_call.1} parent=1 // pred_fallthru
      _
    // Predicated region
    $region14: #{tpu_custom_call.1} parent=1 // pred_check
      _
    $region15: #{tpu_custom_call.1} parent=1 // pred_check_branch
      %38 = sbr.rel (0) target = $region17
    $region16: #{tpu_custom_call.1} parent=1 // pred_region
      %39 = dma.done [#allocation5], 64
    $region17: #{tpu_custom_call.1} parent=1 // pred_fallthru
      _
    // Predicated region
    $region18: #{tpu_custom_call.1} parent=1 // pred_check
      _
    $region19: #{tpu_custom_call.1} parent=1 // pred_check_branch
      %41 = sbr.rel (0) target = $region21
    $region20: #{tpu_custom_call.1} parent=1 // pred_region
      %42 = dma.done [#allocation8], 256
    $region21: #{tpu_custom_call.1} parent=1 // pred_fallthru
      _
    %v44 = vld [vmem:[#allocation4] sm:$0xf]
    %v45 = vld [vmem:[#allocation7] sm:$0xf]
    %v46 = vld [vmem:[#allocation7 + $0x4] sm:$0xf]
    %v47 = vld [vmem:[#allocation7 + $0x8] sm:$0xf]
    %v48 = vld [vmem:[#allocation7 + $0xc] sm:$0xf]
    %v49 = vld [vmem:[%s3] sm:$0x1]
    %v51 = vlaneseq
    %v52 = vshrl.u32 %v51, 7
    %v53 = vsub.s32 0, %v52
    %v54 = vrot.slane %v49, %v53
    %v60 = vunpack.c.l.b16 %v45
    %v61 = vunpack.c.l.b16 %v46
    %v62 = vunpack.c.l.b16 %v47
    %v63 = vunpack.c.l.b16 %v48
    %v64 = vpack.c.b16 %v61, %v60
    %v65 = vpack.c.b16 %v63, %v62
    %vm68 = vcmask 261120
    %v70 = vsel %vm68, %v44, 0
    %72 = vmatprep.subr.bf16.mxu0 0
    %73 = vmatpush1.bf16.msra.mxu0 %v64
    %74 = vmatprep.subr.bf16.mxu0 0
    %75 = vmatpush1.bf16.msra.mxu0 %v65
    %76 = vmatprep.subr.bf16.mxu0 0
    %77 = vmatpush1.bf16.msra.mxu0 0
    %78 = vmatprep.subr.bf16.mxu0 0
    %79 = vmatpush1.bf16.msra.mxu0 0
    %80 = vmatprep.subr.bf16.mxu0 0
    %81 = vmatpush1.bf16.msra.mxu0 0
    %82 = vmatprep.subr.bf16.mxu0 0
    %83 = vmatpush1.bf16.msra.mxu0 0
    %84 = vmatprep.subr.bf16.mxu0 0
    %85 = vmatpush1.bf16.msra.mxu0 0
    %86 = vmatprep.subr.bf16.mxu0 0
    %87 = vmatpush1.bf16.msra.mxu0 0
    %88 = vmatprep.subr.bf16.mxu0 0
    %89 = vmatpush1.bf16.msra.mxu0 0
    %90 = vmatprep.subr.bf16.mxu0 0
    %91 = vmatpush1.bf16.msra.mxu0 0
    %92 = vmatprep.subr.bf16.mxu0 0
    %93 = vmatpush1.bf16.msra.mxu0 0
    %94 = vmatprep.subr.bf16.mxu0 0
    %95 = vmatpush1.bf16.msra.mxu0 0
    %96 = vmatprep.subr.bf16.mxu0 0
    %97 = vmatpush1.bf16.msra.mxu0 0
    %98 = vmatprep.subr.bf16.mxu0 0
    %99 = vmatpush1.bf16.msra.mxu0 0
    %100 = vmatprep.subr.bf16.mxu0 0
    %101 = vmatpush1.bf16.msra.mxu0 0
    %102 = vmatprep.subr.bf16.mxu0 0
    %103 = vmatpush1.bf16.msra.mxu0 0
    %104 = vmatprep.mubr.bf16.mxu0 0
    %105 = vmatmul.mubr.bf16.gmra.mrb[0].mxu0 %v70
    %v106 = vpop.f32.mrb[0].mxu0
    %v107 = vadd.f32 %v54, %v106
    %v108 = vpop.f32.mrb[0].mxu0
    %v109 = vpop.f32.mrb[0].mxu0
    %v110 = vpop.f32.mrb[0].mxu0
    %111 = vdwg.mxu0
    %v112 = vmax.f32 %v107, 0.0
    %vm113 = vcmask 523264
    %114 = vst.msk [vmem:[#allocation9] sm:$0xff] %vm113, %v112
    // Predicated region
    $region22: #{tpu_custom_call.1} parent=1 // pred_check
      _
    $region23: #{tpu_custom_call.1} parent=1 // pred_check_branch
      %116 = sbr.rel (0) target = $region25
    $region24: #{tpu_custom_call.1} parent=1 // pred_region
      %s118 = ssub.s32 128, 128
      %119 = vsyncadd [#allocation6], %s118
      %s121 = sshll.u32 [#allocation9], 4
      %s122 = int_to_ptr.vmem [resolvable:$true] %s121
      %124 = dma.vmem_to_hbm [thread:$0]  %s122, 128, %s4, [#allocation6]
    $region25: #{tpu_custom_call.1} parent=1 // pred_fallthru
      _
    // Predicated region
    $region26: #{tpu_custom_call.1} parent=1 // pred_check
      _
    $region27: #{tpu_custom_call.1} parent=1 // pred_check_branch
      %126 = sbr.rel (0) target = $region29
    $region28: #{tpu_custom_call.1} parent=1 // pred_region
      %127 = dma.done [#allocation6], 128
    $region29: #{tpu_custom_call.1} parent=1 // pred_fallthru
      _
    %128 = vsyncpa [#allocation5], 1
    %129 = vsyncpa [#allocation8], 1
    %130 = vsyncpa [#allocation6], 1

</llo_original>
